<compile_context>
chip_gen: v6e
topology: v6e:2x2x1
jax: 0.10.0
libtpu: 0.0.40
codegen_flags: <defaults>
</compile_context>

<pallas_src>
import functools

import jax
import jax.numpy as jnp
from jax.experimental import pallas as pl
from jax.experimental.pallas import tpu as pltpu

KH, KW = 3, 3          # nn.Conv2d(kernel_size=3, stride=1, padding=0)
K_TAPS = KH * KW


def conv2d_kernel(x_ref, w_ref, o_ref, *, w_in, m_out, k_pad):
    """Valid 3x3 conv (+bias) as a single lane-dense GEMM, patch kept in vregs.

    x_ref: (C, M + S)     zero-padded, lane-flattened input planes
                          (column m = n*H*W + h*W + w,  S = (KH-1)*W + (KW-1))
    w_ref: (O_PAD, K_PAD) weights, columns ordered (kh, kw, c); column K_TAPS*C
                          holds the bias; remaining padded columns are zero.
    o_ref: (O_PAD, M)     output, column m = n*H*W + h*W + w
                          (padded channels / border columns trimmed outside)
    """
    c_in = x_ref.shape[0]
    k = K_TAPS * c_in

    # Patch ("im2col") matrix built directly in registers: each tap (kh, kw) is
    # a static lane-shifted copy of the C input planes; row `k` is all-ones so
    # the bias column of w_ref lands in the GEMM; the rest is explicit zeros
    # (never multiply uninitialized data into the accumulator).
    rows = []
    for kh in range(KH):
        for kw in range(KW):
            shift = kh * w_in + kw
            rows.append(x_ref[:, pl.ds(shift, m_out)])
    rows.append(jnp.ones((1, m_out), jnp.float32))          # bias row
    if k_pad > k + 1:
        rows.append(jnp.zeros((k_pad - k - 1, m_out), jnp.float32))
    patch = jnp.concatenate(rows, axis=0)                    # (K_PAD, M)

    # One MXU matmul with the long spatial dim (M) on lanes; accumulator and
    # output are (O_PAD, M), fully lane- and sublane-dense, unmasked stores.
    o_ref[...] = jnp.dot(
        w_ref[...], patch, preferred_element_type=jnp.float32
    ).astype(o_ref.dtype)


def conv2d_pallas(x_nchw, w_oihw, bias):
    """nn.Conv2d(3, 6, kernel_size=3, stride=1, padding=0) forward."""
    N, C, H, W = x_nchw.shape
    O = w_oihw.shape[0]
    HO, WO = H - KH + 1, W - KW + 1

    M = N * H * W                          # lane-flattened spatial extent
    S_MAX = (KH - 1) * W + (KW - 1)        # largest tap shift
    K = K_TAPS * C                         # 27 real contraction rows
    K_PAD = pl.cdiv(K + 1, 8) * 8          # +1 bias row, pad to sublane granule
    O_PAD = pl.cdiv(O, 8) * 8              # dense-sublane output (6 -> 8)

    # ---- wrapper-side layout plumbing (cheap XLA ops on ~10 KB) ----
    # (C, N*H*W) with spatial on the lane axis, zero-padded so every tap shift
    # stays in bounds.
    x_flat = jnp.transpose(x_nchw, (1, 0, 2, 3)).reshape(C, M)
    x_flat = jnp.pad(x_flat, ((0, 0), (0, S_MAX)))
    # Weight columns ordered (kh, kw, c) to match the patch rows; column K is
    # the bias (multiplies the all-ones patch row); pad O->O_PAD, K+1->K_PAD.
    w_mat = jnp.transpose(w_oihw, (0, 2, 3, 1)).reshape(O, K)
    w_mat = jnp.concatenate([w_mat, bias.reshape(O, 1)], axis=1)
    w_mat = jnp.pad(w_mat, ((0, O_PAD - O), (0, K_PAD - K - 1)))

    kernel = functools.partial(conv2d_kernel, w_in=W, m_out=M, k_pad=K_PAD)
    cost = pl.CostEstimate(
        flops=2 * O_PAD * K_PAD * M,
        transcendentals=0,
        bytes_accessed=4 * (x_flat.size + w_mat.size + O_PAD * M),
    )
    out_flat = pl.pallas_call(
        kernel,
        out_shape=jax.ShapeDtypeStruct((O_PAD, M), x_nchw.dtype),
        in_specs=[
            pl.BlockSpec(memory_space=pltpu.MemorySpace.VMEM),
            pl.BlockSpec(memory_space=pltpu.MemorySpace.VMEM),
        ],
        out_specs=pl.BlockSpec(memory_space=pltpu.MemorySpace.VMEM),
        cost_estimate=cost,
    )(x_flat, w_mat)

    # Drop padded channels and invalid border columns (h >= HO or w >= WO),
    # restore NCHW.
    out = out_flat[:O].reshape(O, N, H, W)[:, :, :HO, :WO]
    return jnp.transpose(out, (1, 0, 2, 3))


if __name__ == "__main__":
    key = jax.random.PRNGKey(0)
    k_x, k_w, k_b = jax.random.split(key, 3)

    # CnnModel: Conv2d(in_channels=3, out_channels=6, kernel_size=3)
    N, C_in, H, W = 2, 3, 16, 16
    C_out = 6

    x = jax.random.normal(k_x, (N, C_in, H, W), dtype=jnp.float32)
    # Deterministic parameter init (PyTorch-style uniform bound, fixed seed).
    bound = 1.0 / (C_in * KH * KW) ** 0.5
    w = jax.random.uniform(k_w, (C_out, C_in, KH, KW), jnp.float32, -bound, bound)
    b = jax.random.uniform(k_b, (C_out,), jnp.float32, -bound, bound)

    out = jax.block_until_ready(conv2d_pallas(x, w, b))
    assert out.shape == (N, C_out, H - KH + 1, W - KW + 1), out.shape

    # Sanity-check against XLA's conv.
    ref = jax.lax.conv_general_dilated(
        x, w, window_strides=(1, 1), padding="VALID",
        dimension_numbers=("NCHW", "OIHW", "NCHW"),
    ) + b.reshape(1, C_out, 1, 1)
    assert jnp.allclose(out, ref, atol=1e-5, rtol=1e-5)

    print("KERNEL_OK")
</pallas_src>

<mosaic_0001>
module attributes {stable_mosaic.version = 11 : i64} {
  func.func @conv2d_kernel(%arg0: memref<3x546xf32, #tpu.memory_space<vmem>>, %arg1: memref<8x32xf32, #tpu.memory_space<vmem>>, %arg2: memref<8x512xf32, #tpu.memory_space<vmem>>) attributes {dimension_semantics = [], scalar_prefetch = 0 : i64, scratch_operands = 0 : i64, tpu.core_type = #tpu.core_type<tc>} {
    %c0 = arith.constant 0 : index
    %c0_0 = arith.constant 0 : index
    %0 = vector.load %arg0[%c0, %c0_0] : memref<3x546xf32, #tpu.memory_space<vmem>>, vector<3x512xf32>
    %c0_1 = arith.constant 0 : index
    %c1 = arith.constant 1 : index
    %1 = vector.load %arg0[%c0_1, %c1] : memref<3x546xf32, #tpu.memory_space<vmem>>, vector<3x512xf32>
    %c0_2 = arith.constant 0 : index
    %c2 = arith.constant 2 : index
    %2 = vector.load %arg0[%c0_2, %c2] : memref<3x546xf32, #tpu.memory_space<vmem>>, vector<3x512xf32>
    %c0_3 = arith.constant 0 : index
    %c16 = arith.constant 16 : index
    %3 = vector.load %arg0[%c0_3, %c16] : memref<3x546xf32, #tpu.memory_space<vmem>>, vector<3x512xf32>
    %c0_4 = arith.constant 0 : index
    %c17 = arith.constant 17 : index
    %4 = vector.load %arg0[%c0_4, %c17] : memref<3x546xf32, #tpu.memory_space<vmem>>, vector<3x512xf32>
    %c0_5 = arith.constant 0 : index
    %c18 = arith.constant 18 : index
    %5 = vector.load %arg0[%c0_5, %c18] : memref<3x546xf32, #tpu.memory_space<vmem>>, vector<3x512xf32>
    %c0_6 = arith.constant 0 : index
    %c32 = arith.constant 32 : index
    %6 = vector.load %arg0[%c0_6, %c32] : memref<3x546xf32, #tpu.memory_space<vmem>>, vector<3x512xf32>
    %c0_7 = arith.constant 0 : index
    %c33 = arith.constant 33 : index
    %7 = vector.load %arg0[%c0_7, %c33] : memref<3x546xf32, #tpu.memory_space<vmem>>, vector<3x512xf32>
    %c0_8 = arith.constant 0 : index
    %c34 = arith.constant 34 : index
    %8 = vector.load %arg0[%c0_8, %c34] : memref<3x546xf32, #tpu.memory_space<vmem>>, vector<3x512xf32>
    %cst = arith.constant 1.000000e+00 : f32
    %9 = vector.broadcast %cst : f32 to vector<1x512xf32>
    %cst_9 = arith.constant 0.000000e+00 : f32
    %10 = vector.broadcast %cst_9 : f32 to vector<4x512xf32>
    %11 = tpu.concatenate %0, %1, %2, %3, %4, %5, %6, %7, %8, %9, %10 in 0 : vector<3x512xf32>, vector<3x512xf32>, vector<3x512xf32>, vector<3x512xf32>, vector<3x512xf32>, vector<3x512xf32>, vector<3x512xf32>, vector<3x512xf32>, vector<3x512xf32>, vector<1x512xf32>, vector<4x512xf32> -> vector<32x512xf32>
    %c0_10 = arith.constant 0 : index
    %c0_11 = arith.constant 0 : index
    %12 = vector.load %arg1[%c0_10, %c0_11] : memref<8x32xf32, #tpu.memory_space<vmem>>, vector<8x32xf32>
    %cst_12 = arith.constant dense<0.000000e+00> : vector<8x512xf32>
    %13 = tpu.matmul %12, %11, %cst_12 {dimension_numbers = #tpu.dot_dimension_numbers<[1], [0], [0], [1], [0, 0, 1, 1], [], []>} : vector<8x32xf32>, vector<32x512xf32>, vector<8x512xf32> -> vector<8x512xf32>
    %c0_13 = arith.constant 0 : index
    %c0_14 = arith.constant 0 : index
    %14 = vector.load %arg2[%c0_13, %c0_14] : memref<8x512xf32, #tpu.memory_space<vmem>>, vector<8x512xf32>
    tpu.vector_store %arg2[%c0_13, %c0_14], %13 {strides = array<i32>} : memref<8x512xf32, #tpu.memory_space<vmem>>, vector<8x512xf32>,
    return
  }
}

</mosaic_0001>

<llo_original>
// kernel: tpu_custom_call.1
$region0: #{tpu_custom_call.1}
  #allocation0 [shape = 'u32[]', space=smem, size = 0x4, offset = 0x4, fixed_abs, tag = 'smem constant byte address 0x4 - core index']
  #allocation1 [shape = 'u32[144,128]{1,0:T(1,128)}', space=vmem, size = 0x12000, scoped, tag = 'internal scratch']
  %s0 = inlined_call_operand.hbm [shape: f32[3,546], index: 0, kind: input, shape index: {}]
  %s1 = inlined_call_operand.hbm [shape: f32[8,32], index: 1, kind: input, shape index: {}]
  %s2 = inlined_call_operand.hbm [shape: f32[8,512], index: 2, kind: output, shape index: {}]
  %s3 = sld [smem:[#allocation0]]
  $region26: #{tpu_custom_call.1} parent=0
    _
  %s5 = ssub.s32 1, %s3
  %s6 = scalar_select 0, %s5, %s3
  $region1: #{tpu_custom_call.1} parent=0
    #allocation2 [shape = 'u8[10240]{0}', space=vmem, size = 0x2800, scoped, tag = 'input window, operand 0, single buffered']
    #allocation3 [shape = 's32[1]{0}', space=sflag, size = 0x4, scoped, tag = 'scoped memory for tpu_custom_call.1']
    #allocation4 [shape = 's32[1]{0}', space=sflag, size = 0x4, scoped, tag = 'scoped memory for tpu_custom_call.1']
    #allocation5 [shape = 'u8[4096]{0}', space=vmem, size = 0x1000, scoped, tag = 'input window, operand 1, single buffered']
    #allocation6 [shape = 's32[1]{0}', space=sflag, size = 0x4, scoped, tag = 'scoped memory for tpu_custom_call.1']
    #allocation7 [shape = 'u8[16384]{0}', space=vmem, size = 0x4000, scoped, tag = 'output window, operand 0, single buffered']
    %7 = vsyncpa [#allocation3], 0
    %8 = vsyncpa [#allocation6], 0
    %9 = vsyncpa [#allocation4], 0
    // Predicated region
    $region2: #{tpu_custom_call.1} parent=1 // pred_check
      _
    $region3: #{tpu_custom_call.1} parent=1 // pred_check_branch
      %11 = sbr.rel (0) target = $region5
    $region4: #{tpu_custom_call.1} parent=1 // pred_region
      %s13 = ssub.s32 320, 320
      %14 = vsyncadd [#allocation3], %s13
      %s16 = sshll.u32 [#allocation2], 4
      %s17 = int_to_ptr.vmem [resolvable:$true] %s16
      %19 = dma.hbm_to_vmem [thread:$0]  %s0, 320, %s17, [#allocation3]
    $region5: #{tpu_custom_call.1} parent=1 // pred_fallthru
      _
    // Predicated region
    $region6: #{tpu_custom_call.1} parent=1 // pred_check
      _
    $region7: #{tpu_custom_call.1} parent=1 // pred_check_branch
      %21 = sbr.rel (0) target = $region9
    $region8: #{tpu_custom_call.1} parent=1 // pred_region
      %s23 = ssub.s32 128, 128
      %24 = vsyncadd [#allocation6], %s23
      %s26 = sshll.u32 [#allocation5], 4
      %s27 = int_to_ptr.vmem [resolvable:$true] %s26
      %29 = dma.hbm_to_vmem [thread:$0]  %s1, 128, %s27, [#allocation6]
    $region9: #{tpu_custom_call.1} parent=1 // pred_fallthru
      _
    // Predicated region
    $region10: #{tpu_custom_call.1} parent=1 // pred_check
      _
    $region11: #{tpu_custom_call.1} parent=1 // pred_check_branch
      %31 = sbr.rel (0) target = $region13
    $region12: #{tpu_custom_call.1} parent=1 // pred_region
      %32 = dma.done [#allocation3], 320
    $region13: #{tpu_custom_call.1} parent=1 // pred_fallthru
      _
    // Predicated region
    $region14: #{tpu_custom_call.1} parent=1 // pred_check
      _
    $region15: #{tpu_custom_call.1} parent=1 // pred_check_branch
      %34 = sbr.rel (0) target = $region17
    $region16: #{tpu_custom_call.1} parent=1 // pred_region
      %35 = dma.done [#allocation6], 128
    $region17: #{tpu_custom_call.1} parent=1 // pred_fallthru
      _
    %v36 = vld [vmem:[#allocation2] sm:$0x77]
    %v37 = vld [vmem:[#allocation2 + $0x8] sm:$0x77]
    %v38 = vld [vmem:[#allocation2 + $0x10] sm:$0x7]
    %v41 = vcombine.high %v36, %v36
    %v42 = vcombine.high %v37, %v37
    %v46 = vrot.slane %v36, 5
    %v47 = vrot.slane %v41, 5
    %v48 = vrot.slane %v37, 5
    %v49 = vrot.slane %v42, 5
    %v50 = vrot.slane %v38, 5
    %51 = vrot.lane.b32.xlu0 %v46, 127
    %v52 = vpop.permute.xlu0 %51
    %53 = vrot.lane.b32.xlu0 %v47, 127
    %v54 = vpop.permute.xlu0 %53
    %55 = vrot.lane.b32.xlu0 %v48, 127
    %v56 = vpop.permute.xlu0 %55
    %57 = vrot.lane.b32.xlu0 %v49, 127
    %v58 = vpop.permute.xlu0 %57
    %59 = vrot.lane.b32.xlu0 %v50, 127
    %v60 = vpop.permute.xlu0 %59
    %vm61 = vcmask 1039360
    %v62 = vsel %vm61, %v52, %v54
    %v63 = vsel %vm61, %v54, %v56
    %v64 = vsel %vm61, %v56, %v58
    %v65 = vsel %vm61, %v58, %v60
    %v70 = vrot.slane %v36, 2
    %v71 = vrot.slane %v41, 2
    %v72 = vrot.slane %v37, 2
    %v73 = vrot.slane %v42, 2
    %v74 = vrot.slane %v38, 2
    %75 = vrot.lane.b32.xlu0 %v70, 126
    %v76 = vpop.permute.xlu0 %75
    %77 = vrot.lane.b32.xlu0 %v71, 126
    %v78 = vpop.permute.xlu0 %77
    %79 = vrot.lane.b32.xlu0 %v72, 126
    %v80 = vpop.permute.xlu0 %79
    %81 = vrot.lane.b32.xlu0 %v73, 126
    %v82 = vpop.permute.xlu0 %81
    %83 = vrot.lane.b32.xlu0 %v74, 126
    %v84 = vpop.permute.xlu0 %83
    %vm85 = vcmask 1031168
    %v86 = vsel %vm85, %v76, %v78
    %v87 = vsel %vm85, %v78, %v80
    %v88 = vsel %vm85, %v80, %v82
    %v89 = vsel %vm85, %v82, %v84
    %v94 = vrot.slane %v36, 7
    %v95 = vrot.slane %v41, 7
    %v96 = vrot.slane %v37, 7
    %v97 = vrot.slane %v42, 7
    %v98 = vrot.slane %v38, 7
    %99 = vrot.lane.b32.xlu0 %v94, 112
    %v100 = vpop.permute.xlu0 %99
    %101 = vrot.lane.b32.xlu0 %v95, 112
    %v102 = vpop.permute.xlu0 %101
    %103 = vrot.lane.b32.xlu0 %v96, 112
    %v104 = vpop.permute.xlu0 %103
    %105 = vrot.lane.b32.xlu0 %v97, 112
    %v106 = vpop.permute.xlu0 %105
    %107 = vrot.lane.b32.xlu0 %v98, 112
    %v108 = vpop.permute.xlu0 %107
    %vm109 = vcmask 916480
    %v110 = vsel %vm109, %v100, %v102
    %v111 = vsel %vm109, %v102, %v104
    %v112 = vsel %vm109, %v104, %v106
    %v113 = vsel %vm109, %v106, %v108
    %v118 = vcombine.low %v36, %v36
    %v119 = vcombine.low %v37, %v37
    %v120 = vcombine.low %v38, %v38
    %121 = vrot.lane.b32.xlu0 %v118, 111
    %v122 = vpop.permute.xlu0 %121
    %123 = vrot.lane.b32.xlu0 %v36, 111
    %v124 = vpop.permute.xlu0 %123
    %125 = vrot.lane.b32.xlu0 %v119, 111
    %v126 = vpop.permute.xlu0 %125
    %127 = vrot.lane.b32.xlu0 %v37, 111
    %v128 = vpop.permute.xlu0 %127
    %129 = vrot.lane.b32.xlu0 %v120, 111
    %v130 = vpop.permute.xlu0 %129
    %vm131 = vcmask 908288
    %v132 = vsel %vm131, %v122, %v124
    %v133 = vsel %vm131, %v124, %v126
    %v134 = vsel %vm131, %v126, %v128
    %v135 = vsel %vm131, %v128, %v130
    %v140 = vrot.slane %v36, 1
    %v141 = vrot.slane %v41, 1
    %v142 = vrot.slane %v37, 1
    %v143 = vrot.slane %v42, 1
    %v144 = vrot.slane %v38, 1
    %145 = vrot.lane.b32.xlu0 %v140, 110
    %v146 = vpop.permute.xlu0 %145
    %147 = vrot.lane.b32.xlu0 %v141, 110
    %v148 = vpop.permute.xlu0 %147
    %149 = vrot.lane.b32.xlu0 %v142, 110
    %v150 = vpop.permute.xlu0 %149
    %151 = vrot.lane.b32.xlu0 %v143, 110
    %v152 = vpop.permute.xlu0 %151
    %153 = vrot.lane.b32.xlu0 %v144, 110
    %v154 = vpop.permute.xlu0 %153
    %vm155 = vcmask 900096
    %v156 = vsel %vm155, %v146, %v148
    %v157 = vsel %vm155, %v148, %v150
    %v158 = vsel %vm155, %v150, %v152
    %v159 = vsel %vm155, %v152, %v154
    %v164 = vrot.slane %v36, 6
    %v165 = vrot.slane %v41, 6
    %v166 = vrot.slane %v37, 6
    %v167 = vrot.slane %v42, 6
    %v168 = vrot.slane %v38, 6
    %169 = vrot.lane.b32.xlu0 %v164, 96
    %v170 = vpop.permute.xlu0 %169
    %171 = vrot.lane.b32.xlu0 %v165, 96
    %v172 = vpop.permute.xlu0 %171
    %173 = vrot.lane.b32.xlu0 %v166, 96
    %v174 = vpop.permute.xlu0 %173
    %175 = vrot.lane.b32.xlu0 %v167, 96
    %v176 = vpop.permute.xlu0 %175
    %177 = vrot.lane.b32.xlu0 %v168, 96
    %v178 = vpop.permute.xlu0 %177
    %vm179 = vcmask 785408
    %v180 = vsel %vm179, %v170, %v172
    %v181 = vsel %vm179, %v172, %v174
    %v182 = vsel %vm179, %v174, %v176
    %v183 = vsel %vm179, %v176, %v178
    %v188 = vrot.slane %v36, 3
    %v189 = vrot.slane %v41, 3
    %v190 = vrot.slane %v37, 3
    %v191 = vrot.slane %v42, 3
    %v192 = vrot.slane %v38, 3
    %193 = vrot.lane.b32.xlu0 %v188, 95
    %v194 = vpop.permute.xlu0 %193
    %195 = vrot.lane.b32.xlu0 %v189, 95
    %v196 = vpop.permute.xlu0 %195
    %197 = vrot.lane.b32.xlu0 %v190, 95
    %v198 = vpop.permute.xlu0 %197
    %199 = vrot.lane.b32.xlu0 %v191, 95
    %v200 = vpop.permute.xlu0 %199
    %201 = vrot.lane.b32.xlu0 %v192, 95
    %v202 = vpop.permute.xlu0 %201
    %vm203 = vcmask 777216
    %v204 = vsel %vm203, %v194, %v196
    %v205 = vsel %vm203, %v196, %v198
    %v206 = vsel %vm203, %v198, %v200
    %v207 = vsel %vm203, %v200, %v202
    %212 = vrot.lane.b32.xlu0 %v36, 94
    %v213 = vpop.permute.xlu0 %212
    %214 = vrot.lane.b32.xlu0 %v41, 94
    %v215 = vpop.permute.xlu0 %214
    %216 = vrot.lane.b32.xlu0 %v37, 94
    %v217 = vpop.permute.xlu0 %216
    %218 = vrot.lane.b32.xlu0 %v42, 94
    %v219 = vpop.permute.xlu0 %218
    %220 = vrot.lane.b32.xlu0 %v38, 94
    %v221 = vpop.permute.xlu0 %220
    %vm222 = vcmask 769024
    %v223 = vsel %vm222, %v213, %v215
    %v224 = vsel %vm222, %v215, %v217
    %v225 = vsel %vm222, %v217, %v219
    %v226 = vsel %vm222, %v219, %v221
    %vm231 = vcmask 1042432
    %v232 = vsel %vm231, %v36, %v62
    %v233 = vsel %vm231, %v41, %v63
    %v234 = vsel %vm231, %v37, %v64
    %v235 = vsel %vm231, %v42, %v65
    %vm236 = vcmask 1045504
    %v237 = vsel %vm236, %v232, %v86
    %v238 = vsel %vm236, %v233, %v87
    %v239 = vsel %vm236, %v234, %v88
    %v240 = vsel %vm236, %v235, %v89
    %vm241 = vcmask 1040384
    %v242 = vsel %vm241, %v86, %v110
    %v243 = vsel %vm241, %v87, %v111
    %v244 = vsel %vm241, %v88, %v112
    %v245 = vsel %vm241, %v89, %v113
    %vm246 = vcmask 1043456
    %v247 = vsel %vm246, %v242, %v132
    %v248 = vsel %vm246, %v243, %v133
    %v249 = vsel %vm246, %v244, %v134
    %v250 = vsel %vm246, %v245, %v135
    %vm251 = vcmask 1046528
    %v252 = vsel %vm251, %v247, %v156
    %v253 = vsel %vm251, %v248, %v157
    %v254 = vsel %vm251, %v249, %v158
    %v255 = vsel %vm251, %v250, %v159
    %vm256 = vcmask 1041408
    %v257 = vsel %vm256, %v156, %v180
    %v258 = vsel %vm256, %v157, %v181
    %v259 = vsel %vm256, %v158, %v182
    %v260 = vsel %vm256, %v159, %v183
    %vm261 = vcmask 1044480
    %v262 = vsel %vm261, %v257, %v204
    %v263 = vsel %vm261, %v258, %v205
    %v264 = vsel %vm261, %v259, %v206
    %v265 = vsel %vm261, %v260, %v207
    %v266 = vsel %vm231, %v223, 1.0
    %v267 = vsel %vm231, %v224, 1.0
    %v268 = vsel %vm231, %v225, 1.0
    %v269 = vsel %vm231, %v226, 1.0
    %v270 = vsel %vm246, %v266, 0.0
    %v271 = vsel %vm246, %v267, 0.0
    %v272 = vsel %vm246, %v268, 0.0
    %v273 = vsel %vm246, %v269, 0.0
    %v274 = vld [vmem:[#allocation5] sm:$0xff]
    %vm275 = vcmask 261120
    %v277 = vsel %vm275, %v274, 0
    %279 = vmatprep.subr.mxu0 0.0
    %280 = vmatpush1.msra.mxu0 0.0
    %281 = vmatprep.subr.mxu0 0.0
    %282 = vmatpush1.msra.mxu0 0.0
    %283 = vmatprep.subr.mxu0 0.0
    %284 = vmatpush1.msra.mxu0 0.0
    %285 = vmatprep.subr.mxu0 0.0
    %286 = vmatpush1.msra.mxu0 0.0
    %287 = vmatprep.subr.mxu0 0.0
    %288 = vmatpush1.msra.mxu0 0.0
    %289 = vmatprep.subr.mxu0 0.0
    %290 = vmatpush1.msra.mxu0 0.0
    %291 = vmatprep.subr.mxu0 0.0
    %292 = vmatpush1.msra.mxu0 0.0
    %293 = vmatprep.subr.mxu0 0.0
    %294 = vmatpush1.msra.mxu0 0.0
    %295 = vmatprep.subr.mxu0 0.0
    %296 = vmatpush1.msra.mxu0 0.0
    %297 = vmatprep.subr.mxu0 0.0
    %298 = vmatpush1.msra.mxu0 0.0
    %299 = vmatprep.subr.mxu0 0.0
    %300 = vmatpush1.msra.mxu0 0.0
    %301 = vmatprep.subr.mxu0 0.0
    %302 = vmatpush1.msra.mxu0 0.0
    %303 = vmatprep.subr.mxu0 %v271
    %304 = vmatpush1.msra.mxu0 %v270
    %305 = vmatprep.subr.mxu0 %v263
    %306 = vmatpush1.msra.mxu0 %v262
    %307 = vmatprep.subr.mxu0 %v253
    %308 = vmatpush1.msra.mxu0 %v252
    %309 = vmatprep.subr.mxu0 %v238
    %310 = vmatpush1.msra.mxu0 %v237
    %311 = vmatprep.subr.mxu0 0.0
    %312 = vmatpush2.msra.mxu0 0.0
    %313 = vmatprep.subr.mxu0 0.0
    %314 = vmatpush2.msra.mxu0 0.0
    %315 = vmatprep.subr.mxu0 0.0
    %316 = vmatpush2.msra.mxu0 0.0
    %317 = vmatprep.subr.mxu0 0.0
    %318 = vmatpush2.msra.mxu0 0.0
    %319 = vmatprep.subr.mxu0 0.0
    %320 = vmatpush2.msra.mxu0 0.0
    %321 = vmatprep.subr.mxu0 0.0
    %322 = vmatpush2.msra.mxu0 0.0
    %323 = vmatprep.subr.mxu0 0.0
    %324 = vmatpush2.msra.mxu0 0.0
    %325 = vmatprep.subr.mxu0 0.0
    %326 = vmatpush2.msra.mxu0 0.0
    %327 = vmatprep.subr.mxu0 0.0
    %328 = vmatpush2.msra.mxu0 0.0
    %329 = vmatprep.subr.mxu0 0.0
    %330 = vmatpush2.msra.mxu0 0.0
    %331 = vmatprep.subr.mxu0 0.0
    %332 = vmatpush2.msra.mxu0 0.0
    %333 = vmatprep.subr.mxu0 0.0
    %334 = vmatpush2.msra.mxu0 0.0
    %335 = vmatprep.subr.mxu0 0.0
    %336 = vmatpush2.msra.mxu0 0.0
    %337 = vmatprep.subr.mxu0 0.0
    %338 = vmatpush2.msra.mxu0 0.0
    %339 = vmatprep.subr.mxu0 0.0
    %340 = vmatpush2.msra.mxu0 0.0
    %341 = vmatprep.subr.mxu0 0.0
    %342 = vmatpush2.msra.mxu0 0.0
    %343 = vmatprep.mubr.f32.mxu0 0.0
    %344 = vmatmul.mubr.f32.gmra.mxu0 %v277
    %v345 = vpop.f32.mrf.mxu0
    %v346 = vadd.f32 0.0, %v345
    %v347 = vpop.f32.mrf.mxu0
    %v348 = vadd.f32 0.0, %v347
    %349 = vdwg.mxu0
    %350 = vmatprep.subr.mxu0 0.0
    %351 = vmatpush1.msra.mxu0 0.0
    %352 = vmatprep.subr.mxu0 0.0
    %353 = vmatpush1.msra.mxu0 0.0
    %354 = vmatprep.subr.mxu0 0.0
    %355 = vmatpush1.msra.mxu0 0.0
    %356 = vmatprep.subr.mxu0 0.0
    %357 = vmatpush1.msra.mxu0 0.0
    %358 = vmatprep.subr.mxu0 0.0
    %359 = vmatpush1.msra.mxu0 0.0
    %360 = vmatprep.subr.mxu0 0.0
    %361 = vmatpush1.msra.mxu0 0.0
    %362 = vmatprep.subr.mxu0 0.0
    %363 = vmatpush1.msra.mxu0 0.0
    %364 = vmatprep.subr.mxu0 0.0
    %365 = vmatpush1.msra.mxu0 0.0
    %366 = vmatprep.subr.mxu0 0.0
    %367 = vmatpush1.msra.mxu0 0.0
    %368 = vmatprep.subr.mxu0 0.0
    %369 = vmatpush1.msra.mxu0 0.0
    %370 = vmatprep.subr.mxu0 0.0
    %371 = vmatpush1.msra.mxu0 0.0
    %372 = vmatprep.subr.mxu0 0.0
    %373 = vmatpush1.msra.mxu0 0.0
    %374 = vmatprep.subr.mxu0 %v273
    %375 = vmatpush1.msra.mxu0 %v272
    %376 = vmatprep.subr.mxu0 %v265
    %377 = vmatpush1.msra.mxu0 %v264
    %378 = vmatprep.subr.mxu0 %v255
    %379 = vmatpush1.msra.mxu0 %v254
    %380 = vmatprep.subr.mxu0 %v240
    %381 = vmatpush1.msra.mxu0 %v239
    %382 = vmatprep.subr.mxu0 0.0
    %383 = vmatpush2.msra.mxu0 0.0
    %384 = vmatprep.subr.mxu0 0.0
    %385 = vmatpush2.msra.mxu0 0.0
    %386 = vmatprep.subr.mxu0 0.0
    %387 = vmatpush2.msra.mxu0 0.0
    %388 = vmatprep.subr.mxu0 0.0
    %389 = vmatpush2.msra.mxu0 0.0
    %390 = vmatprep.subr.mxu0 0.0
    %391 = vmatpush2.msra.mxu0 0.0
    %392 = vmatprep.subr.mxu0 0.0
    %393 = vmatpush2.msra.mxu0 0.0
    %394 = vmatprep.subr.mxu0 0.0
    %395 = vmatpush2.msra.mxu0 0.0
    %396 = vmatprep.subr.mxu0 0.0
    %397 = vmatpush2.msra.mxu0 0.0
    %398 = vmatprep.subr.mxu0 0.0
    %399 = vmatpush2.msra.mxu0 0.0
    %400 = vmatprep.subr.mxu0 0.0
    %401 = vmatpush2.msra.mxu0 0.0
    %402 = vmatprep.subr.mxu0 0.0
    %403 = vmatpush2.msra.mxu0 0.0
    %404 = vmatprep.subr.mxu0 0.0
    %405 = vmatpush2.msra.mxu0 0.0
    %406 = vmatprep.subr.mxu0 0.0
    %407 = vmatpush2.msra.mxu0 0.0
    %408 = vmatprep.subr.mxu0 0.0
    %409 = vmatpush2.msra.mxu0 0.0
    %410 = vmatprep.subr.mxu0 0.0
    %411 = vmatpush2.msra.mxu0 0.0
    %412 = vmatprep.subr.mxu0 0.0
    %413 = vmatpush2.msra.mxu0 0.0
    %414 = vmatprep.mubr.f32.mxu0 0.0
    %415 = vmatmul.mubr.f32.gmra.mxu0 %v277
    %v416 = vpop.f32.mrf.mxu0
    %v417 = vadd.f32 0.0, %v416
    %v418 = vpop.f32.mrf.mxu0
    %v419 = vadd.f32 0.0, %v418
    %420 = vdwg.mxu0
    %421 = vst [vmem:[#allocation7] sm:$0xff] %v346
    %422 = vst [vmem:[#allocation7 + $0x8] sm:$0xff] %v348
    %423 = vst [vmem:[#allocation7 + $0x10] sm:$0xff] %v417
    %424 = vst [vmem:[#allocation7 + $0x18] sm:$0xff] %v419
    // Predicated region
    $region18: #{tpu_custom_call.1} parent=1 // pred_check
      _
    $region19: #{tpu_custom_call.1} parent=1 // pred_check_branch
      %426 = sbr.rel (0) target = $region21
    $region20: #{tpu_custom_call.1} parent=1 // pred_region
      %s428 = ssub.s32 512, 512
      %429 = vsyncadd [#allocation4], %s428
      %s431 = sshll.u32 [#allocation7], 4
      %s432 = int_to_ptr.vmem [resolvable:$true] %s431
      %434 = dma.vmem_to_hbm [thread:$0]  %s432, 512, %s2, [#allocation4]
    $region21: #{tpu_custom_call.1} parent=1 // pred_fallthru
      _
    // Predicated region
    $region22: #{tpu_custom_call.1} parent=1 // pred_check
      _
    $region23: #{tpu_custom_call.1} parent=1 // pred_check_branch
      %436 = sbr.rel (0) target = $region25
    $region24: #{tpu_custom_call.1} parent=1 // pred_region
      %437 = dma.done [#allocation4], 512
    $region25: #{tpu_custom_call.1} parent=1 // pred_fallthru
      _
    %438 = vsyncpa [#allocation3], 1
    %439 = vsyncpa [#allocation6], 1
    %440 = vsyncpa [#allocation4], 1

</llo_original>
